<compile_context>
chip_gen: v7x
topology: tpu7x:2x2x1
jax: 0.10.0
libtpu: 0.0.40
codegen_flags: <defaults>
</compile_context>

<pallas_src>
import math

import jax
import jax.numpy as jnp
from jax.experimental import pallas as pl
from jax.experimental.pallas import tpu as pltpu


def _round_up(x, m):
    return ((x + m - 1) // m) * m


def _sublane_multiple(dtype):
    # rows per vreg: 8 for 4-byte, 16 for 2-byte, 32 for 1-byte dtypes
    return {4: 8, 2: 16, 1: 32}[jnp.dtype(dtype).itemsize]


def _lora_linear_kernel(x_ref, wt_ref, b_ref, xa_ref, bts_ref, o_ref, acc_ref):
    """One (tm x tn) output tile; K (in_features) tiled on the innermost axis.

    x_ref   : (tm, tk)    compute dtype   input rows, K slab
    wt_ref  : (tk, tn)    compute dtype   frozen base weight, pre-transposed
    b_ref   : (1, tn)     float32         frozen bias (f32 epilogue)
    xa_ref  : (tm, rank)  compute dtype   precomputed x @ A (hoisted)
    bts_ref : (rank, tn)  compute dtype   LoRA B.T pre-scaled by alpha/sqrt(rank)
    o_ref   : (tm, tn)    output dtype
    acc_ref : (tm, tn)    float32         VMEM accumulator
    """
    k = pl.program_id(2)

    @pl.when(k == 0)
    def _init():
        acc_ref[...] = jnp.zeros_like(acc_ref)

    acc_ref[...] += jnp.dot(x_ref[...], wt_ref[...],
                            preferred_element_type=jnp.float32)

    @pl.when(k == pl.num_programs(2) - 1)
    def _epilogue():
        lora = jnp.dot(xa_ref[...], bts_ref[...],
                       preferred_element_type=jnp.float32)
        o_ref[...] = (acc_ref[...] + b_ref[...] + lora).astype(o_ref.dtype)


def make_lora_linear(w, bias, A, B, *, alpha, rank,
                     tm=256, tn=512, tk=2048,
                     compute_dtype=jnp.bfloat16):
    """Build a LoRALinear forward fn(x_2d: (M, in)) -> (M, out).

    Transposes, scale folding, dtype casts and all weight padding are done
    ONCE here (hoisted out of the per-call hot path).
    """
    out_f, in_f = w.shape
    assert A.shape == (in_f, rank) and B.shape == (out_f, rank)
    assert tn % 128 == 0 and tk % 128 == 0, "tn/tk must be multiples of 128"
    scale = alpha / math.sqrt(rank)
    itemsize = jnp.dtype(compute_dtype).itemsize
    sub = _sublane_multiple(compute_dtype)

    # ---- N (output-column) tiling: always a 128 multiple (lane-dense stores);
    # tile when out_f is large so VMEM stays bounded.
    if out_f <= tn:
        tn_eff = _round_up(out_f, 128)
        out_p = tn_eff
    else:
        tn_eff = tn
        out_p = _round_up(out_f, tn_eff)
    grid_n = out_p // tn_eff

    # ---- K (in_features) tiling: bounds VMEM independent of in_f.
    if in_f <= tk:
        tk_eff, in_p = in_f, in_f
    else:
        tk_eff = tk
        in_p = _round_up(in_f, tk_eff)
    grid_k = in_p // tk_eff

    # One-time hoists: transpose, scale folding, dtype cast, padding.
    wt = jnp.asarray(w.T, dtype=compute_dtype)                    # (in, out)
    bts = jnp.asarray(B.T * scale, dtype=compute_dtype)           # (rank, out)
    a_c = jnp.asarray(A, dtype=compute_dtype)                     # (in, rank)
    b2 = jnp.asarray(bias, dtype=jnp.float32).reshape(1, out_f)   # (1, out)
    wt = jnp.pad(wt, ((0, in_p - in_f), (0, out_p - out_f)))
    bts = jnp.pad(bts, ((0, 0), (0, out_p - out_f)))
    b2 = jnp.pad(b2, ((0, 0), (0, out_p - out_f)))

    # Total "weight side" bytes read per pass (W.T + scale*B.T + bias).
    w_bytes = (in_p * out_p + rank * out_p) * itemsize + out_p * 4

    def forward(x2d):
        M = x2d.shape[0]
        out_dtype = x2d.dtype
        out_itemsize = jnp.dtype(out_dtype).itemsize

        # ---- M (row) tiling: large tiles for MXU occupancy, dtype-aware pad.
        tm_eff = _round_up(min(tm, _round_up(M, sub)), sub)
        M_p = _round_up(M, tm_eff)
        grid_m = M_p // tm_eff

        xc = x2d.astype(compute_dtype)
        # LoRA down-projection hoisted out of the kernel: computed ONCE per
        # call instead of once per output-column tile.
        xa = jnp.dot(xc, a_c, preferred_element_type=jnp.float32,
                     precision=jax.lax.Precision.HIGHEST).astype(compute_dtype)
        if M_p != M:
            xc = jnp.pad(xc, ((0, M_p - M), (0, 0)))
            xa = jnp.pad(xa, ((0, M_p - M), (0, 0)))
        if in_p != in_f:
            xc = jnp.pad(xc, ((0, 0), (0, in_p - in_f)))

        # ---- Loop order: re-stream whichever operand costs fewer redundant
        # bytes; never put a degenerate axis first (megacore on v7x).
        x_bytes = M_p * in_p * itemsize
        if grid_n == 1:
            n_outer = False
        elif grid_m == 1:
            n_outer = True
        else:
            n_outer = (grid_n - 1) * x_bytes <= (grid_m - 1) * w_bytes

        if n_outer:
            grid = (grid_n, grid_m, grid_k)
            x_map = lambda j, i, k: (i, k)
            w_map = lambda j, i, k: (k, j)
            col_map = lambda j, i, k: (0, j)
            xa_map = lambda j, i, k: (i, 0)
            o_map = lambda j, i, k: (i, j)
        else:
            grid = (grid_m, grid_n, grid_k)
            x_map = lambda i, j, k: (i, k)
            w_map = lambda i, j, k: (k, j)
            col_map = lambda i, j, k: (0, j)
            xa_map = lambda i, j, k: (i, 0)
            o_map = lambda i, j, k: (i, j)

        # VMEM budget for the chosen tiles (double-buffered blocks + f32
        # accumulator) with headroom; set explicitly so the 16/32 MiB scoped
        # defaults never silently constrain the pipeline.
        blk_bytes = 2 * (tm_eff * tk_eff * itemsize             # x
                         + tk_eff * tn_eff * itemsize           # W.T slab
                         + 8 * tn_eff * 4                       # bias
                         + tm_eff * max(rank, 128) * itemsize   # x @ A
                         + 8 * tn_eff * itemsize                # scale * B.T
                         + tm_eff * tn_eff * out_itemsize)      # out
        blk_bytes += tm_eff * tn_eff * 4                        # accumulator
        vmem_limit = int(min(128 * 2 ** 20, max(32 * 2 ** 20, 2 * blk_bytes)))

        x_reads = grid_n if n_outer else 1
        w_reads = 1 if n_outer else grid_m
        cost = pl.CostEstimate(
            flops=int(2 * M_p * in_p * out_p + 2 * M_p * rank * out_p),
            transcendentals=0,
            bytes_accessed=int(x_reads * x_bytes + w_reads * w_bytes
                               + M_p * rank * itemsize
                               + M_p * out_p * out_itemsize),
        )

        out = pl.pallas_call(
            _lora_linear_kernel,
            out_shape=jax.ShapeDtypeStruct((M_p, out_p), out_dtype),
            grid_spec=pltpu.PrefetchScalarGridSpec(
                num_scalar_prefetch=0,
                grid=grid,
                in_specs=[
                    pl.BlockSpec((tm_eff, tk_eff), x_map),    # x rows / K slab
                    pl.BlockSpec((tk_eff, tn_eff), w_map),    # W.T slab
                    pl.BlockSpec((1, tn_eff), col_map),       # bias
                    pl.BlockSpec((tm_eff, rank), xa_map),     # x @ A (hoisted)
                    pl.BlockSpec((rank, tn_eff), col_map),    # scale * B.T
                ],
                out_specs=pl.BlockSpec((tm_eff, tn_eff), o_map),
                scratch_shapes=[pltpu.VMEM((tm_eff, tn_eff), jnp.float32)],
            ),
            compiler_params=pltpu.CompilerParams(
                dimension_semantics=("parallel", "parallel", "arbitrary"),
                vmem_limit_bytes=vmem_limit),
            cost_estimate=cost,
        )(xc, wt, b2, xa, bts)

        return out[:M, :out_f]

    return forward


if __name__ == "__main__":
    batch, seq = 2, 8
    M = batch * seq
    key = jax.random.PRNGKey(0)
    kx, kw, kb, ka, kbb = jax.random.split(key, 5)
    hi = jax.lax.Precision.HIGHEST

    def reference(x2d, w, bias, A, B, scale):
        base = jnp.dot(x2d, w.T, precision=hi) + bias
        lora = jnp.dot(jnp.dot(x2d, A, precision=hi), B.T, precision=hi)
        return base + lora * scale

    # ---- Test 1: module-sized shapes (in=out=32, rank=4, alpha=16) ----
    in_f, out_f, rank, alpha = 32, 32, 4, 16.0
    scale = alpha / math.sqrt(rank)
    x = jax.random.normal(kx, (batch, seq, in_f), dtype=jnp.float32)
    w = jax.random.normal(kw, (out_f, in_f), dtype=jnp.float32) * 0.05
    bias = jax.random.normal(kb, (out_f,), dtype=jnp.float32) * 0.01
    # LoRA params per LoRALinear.__init__: A ~ N(0, sqrt(rank)/in_f), B = 0.
    A = jax.random.normal(ka, (in_f, rank), dtype=jnp.float32) * (
        math.sqrt(rank) / in_f)
    B_zero = jnp.zeros((out_f, rank), dtype=jnp.float32)
    B_rand = jax.random.normal(kbb, (out_f, rank), dtype=jnp.float32) * 0.05
    x2d = x.reshape(M, in_f)

    # f32 compute path: strict check (B = 0 as at init, and B != 0 as trained).
    for B in (B_zero, B_rand):
        fwd = make_lora_linear(w, bias, A, B, alpha=alpha, rank=rank,
                               compute_dtype=jnp.float32)
        out = fwd(x2d).reshape(batch, seq, out_f)
        jax.block_until_ready(out)
        ref = reference(x2d, w, bias, A, B, scale).reshape(batch, seq, out_f)
        assert jnp.allclose(out, ref, atol=1e-5, rtol=1e-5), "f32 mismatch"

    # bf16 compute (production default), f32 accumulation; loose check.
    fwd_bf16 = make_lora_linear(w, bias, A, B_rand, alpha=alpha, rank=rank)
    out_bf16 = fwd_bf16(x2d).reshape(batch, seq, out_f)
    jax.block_until_ready(out_bf16)
    ref = reference(x2d, w, bias, A, B_rand, scale).reshape(batch, seq, out_f)
    assert jnp.allclose(out_bf16.astype(jnp.float32), ref,
                        atol=5e-2, rtol=5e-2), "bf16 mismatch"

    # ---- Test 2: exercise N / K tiling, the accumulator path and ragged
    # padding with deliberately tiny tiles (grid_n=2, grid_m=2, grid_k=2).
    in_f2, out_f2 = 200, 200
    k2 = jax.random.split(key, 4)
    x2 = jax.random.normal(k2[0], (M, in_f2), dtype=jnp.float32)
    w2 = jax.random.normal(k2[1], (out_f2, in_f2), dtype=jnp.float32) * 0.05
    b2v = jax.random.normal(k2[2], (out_f2,), dtype=jnp.float32) * 0.01
    A2 = jax.random.normal(k2[3], (in_f2, rank), dtype=jnp.float32) * (
        math.sqrt(rank) / in_f2)
    B2 = jax.random.normal(kbb, (out_f2, rank), dtype=jnp.float32) * 0.05
    fwd2 = make_lora_linear(w2, b2v, A2, B2, alpha=alpha, rank=rank,
                            tm=8, tn=128, tk=128, compute_dtype=jnp.float32)
    out2 = fwd2(x2)
    jax.block_until_ready(out2)
    ref2 = reference(x2, w2, b2v, A2, B2, scale)
    assert jnp.allclose(out2, ref2, atol=1e-4, rtol=1e-4), "tiled f32 mismatch"

    print("KERNEL_OK")
</pallas_src>

<mosaic_0001>
module attributes {stable_mosaic.version = 11 : i64} {
  func.func @_lora_linear_kernel(%arg0: i32, %arg1: i32, %arg2: i32, %arg3: memref<16x32xf32, #tpu.memory_space<vmem>>, %arg4: memref<32x128xf32, #tpu.memory_space<vmem>>, %arg5: memref<1x128xf32, #tpu.memory_space<vmem>>, %arg6: memref<16x4xf32, #tpu.memory_space<vmem>>, %arg7: memref<4x128xf32, #tpu.memory_space<vmem>>, %arg8: memref<16x128xf32, #tpu.memory_space<vmem>>, %arg9: memref<16x128xf32, #tpu.memory_space<vmem>>) attributes {dimension_semantics = [#tpu.dimension_semantics<parallel>, #tpu.dimension_semantics<parallel>, #tpu.dimension_semantics<arbitrary>], iteration_bounds = array<i64: 1, 1, 1>, scalar_prefetch = 0 : i64, scratch_operands = 1 : i64, tpu.core_type = #tpu.core_type<tc>, window_params = [{transform_indices = @transform_0, window_bounds = array<i64: 16, 32>}, {transform_indices = @transform_1, window_bounds = array<i64: 32, 128>}, {transform_indices = @transform_2, window_bounds = array<i64: 1, 128>}, {transform_indices = @transform_3, window_bounds = array<i64: 16, 4>}, {transform_indices = @transform_4, window_bounds = array<i64: 4, 128>}, {transform_indices = @transform_5, window_bounds = array<i64: 16, 128>}]} {
    %c0_i32 = arith.constant 0 : i32
    %0 = arith.cmpi eq, %arg2, %c0_i32 : i32
    %1 = arith.extui %0 : i1 to i32
    %c0_i32_0 = arith.constant 0 : i32
    %2 = arith.cmpi ne, %1, %c0_i32_0 : i32
    scf.if %2 {
      %cst_10 = arith.constant 0.000000e+00 : f32
      %12 = vector.broadcast %cst_10 : f32 to vector<16x128xf32>
      %c0_11 = arith.constant 0 : index
      %c0_12 = arith.constant 0 : index
      %13 = vector.load %arg9[%c0_11, %c0_12] : memref<16x128xf32, #tpu.memory_space<vmem>>, vector<16x128xf32>
      tpu.vector_store %arg9[%c0_11, %c0_12], %12 {strides = array<i32>} : memref<16x128xf32, #tpu.memory_space<vmem>>, vector<16x128xf32>,
    } else {
    }
    %c0 = arith.constant 0 : index
    %c0_1 = arith.constant 0 : index
    %3 = vector.load %arg9[%c0, %c0_1] : memref<16x128xf32, #tpu.memory_space<vmem>>, vector<16x128xf32>
    %c0_2 = arith.constant 0 : index
    %c0_3 = arith.constant 0 : index
    %4 = vector.load %arg3[%c0_2, %c0_3] : memref<16x32xf32, #tpu.memory_space<vmem>>, vector<16x32xf32>
    %c0_4 = arith.constant 0 : index
    %c0_5 = arith.constant 0 : index
    %5 = vector.load %arg4[%c0_4, %c0_5] : memref<32x128xf32, #tpu.memory_space<vmem>>, vector<32x128xf32>
    %cst = arith.constant dense<0.000000e+00> : vector<16x128xf32>
    %6 = tpu.matmul %4, %5, %cst {dimension_numbers = #tpu.dot_dimension_numbers<[1], [0], [0], [1], [0, 0, 1, 1], [], []>} : vector<16x32xf32>, vector<32x128xf32>, vector<16x128xf32> -> vector<16x128xf32>
    %7 = arith.addf %3, %6 : vector<16x128xf32>
    %c0_6 = arith.constant 0 : index
    %c0_7 = arith.constant 0 : index
    %8 = vector.load %arg9[%c0_6, %c0_7] : memref<16x128xf32, #tpu.memory_space<vmem>>, vector<16x128xf32>
    tpu.vector_store %arg9[%c0_6, %c0_7], %7 {strides = array<i32>} : memref<16x128xf32, #tpu.memory_space<vmem>>, vector<16x128xf32>,
    %c0_i32_8 = arith.constant 0 : i32
    %9 = arith.cmpi eq, %arg2, %c0_i32_8 : i32
    %10 = arith.extui %9 : i1 to i32
    %c0_i32_9 = arith.constant 0 : i32
    %11 = arith.cmpi ne, %10, %c0_i32_9 : i32
    scf.if %11 {
      %c0_10 = arith.constant 0 : index
      %c0_11 = arith.constant 0 : index
      %12 = vector.load %arg6[%c0_10, %c0_11] : memref<16x4xf32, #tpu.memory_space<vmem>>, vector<16x4xf32>
      %c0_12 = arith.constant 0 : index
      %c0_13 = arith.constant 0 : index
      %13 = vector.load %arg7[%c0_12, %c0_13] : memref<4x128xf32, #tpu.memory_space<vmem>>, vector<4x128xf32>
      %cst_14 = arith.constant dense<0.000000e+00> : vector<16x128xf32>
      %14 = tpu.matmul %12, %13, %cst_14 {dimension_numbers = #tpu.dot_dimension_numbers<[1], [0], [0], [1], [0, 0, 1, 1], [], []>} : vector<16x4xf32>, vector<4x128xf32>, vector<16x128xf32> -> vector<16x128xf32>
      %c0_15 = arith.constant 0 : index
      %c0_16 = arith.constant 0 : index
      %15 = vector.load %arg9[%c0_15, %c0_16] : memref<16x128xf32, #tpu.memory_space<vmem>>, vector<16x128xf32>
      %c0_17 = arith.constant 0 : index
      %c0_18 = arith.constant 0 : index
      %16 = vector.load %arg5[%c0_17, %c0_18] : memref<1x128xf32, #tpu.memory_space<vmem>>, vector<1x128xf32>
      %17 = vector.broadcast %16 : vector<1x128xf32> to vector<16x128xf32>
      %18 = arith.addf %15, %17 : vector<16x128xf32>
      %19 = arith.addf %18, %14 : vector<16x128xf32>
      %c0_19 = arith.constant 0 : index
      %c0_20 = arith.constant 0 : index
      %20 = vector.load %arg8[%c0_19, %c0_20] : memref<16x128xf32, #tpu.memory_space<vmem>>, vector<16x128xf32>
      tpu.vector_store %arg8[%c0_19, %c0_20], %19 {strides = array<i32>} : memref<16x128xf32, #tpu.memory_space<vmem>>, vector<16x128xf32>,
    } else {
    }
    return
  }
  func.func @transform_0(%arg0: i32, %arg1: i32, %arg2: i32) -> (i32, i32) {
    %c0_i32 = arith.constant 0 : i32
    return %arg0, %arg2 : i32, i32
  }
  func.func @transform_1(%arg0: i32, %arg1: i32, %arg2: i32) -> (i32, i32) {
    %c0_i32 = arith.constant 0 : i32
    return %arg2, %arg1 : i32, i32
  }
  func.func @transform_2(%arg0: i32, %arg1: i32, %arg2: i32) -> (i32, i32) {
    %c0_i32 = arith.constant 0 : i32
    %c0_i32_0 = arith.constant 0 : i32
    return %c0_i32, %arg1 : i32, i32
  }
  func.func @transform_3(%arg0: i32, %arg1: i32, %arg2: i32) -> (i32, i32) {
    %c0_i32 = arith.constant 0 : i32
    %c0_i32_0 = arith.constant 0 : i32
    return %arg0, %c0_i32 : i32, i32
  }
  func.func @transform_4(%arg0: i32, %arg1: i32, %arg2: i32) -> (i32, i32) {
    %c0_i32 = arith.constant 0 : i32
    %c0_i32_0 = arith.constant 0 : i32
    return %c0_i32, %arg1 : i32, i32
  }
  func.func @transform_5(%arg0: i32, %arg1: i32, %arg2: i32) -> (i32, i32) {
    %c0_i32 = arith.constant 0 : i32
    return %arg0, %arg1 : i32, i32
  }
}

</mosaic_0001>

<llo_original>
// kernel: tpu_custom_call.1
$region0: #{tpu_custom_call.1}
  #allocation0 [shape = 'u32[]', space=smem, size = 0x4, offset = 0x4, fixed_abs, tag = 'smem constant byte address 0x4 - core index']
  #allocation1 [shape = 'u32[144,128]{1,0:T(1,128)}', space=vmem, size = 0x12000, scoped, tag = 'internal scratch']
  #allocation2 [shape = 'f32[16,128]{1,0:T(8,128)}', space=vmem, size = 0x2000, scoped, tag = 'scratch operand']
  %s0 = inlined_call_operand.vmem [shape: f32[16,32], index: 0, kind: input, shape index: {}]
  %s1 = inlined_call_operand.hbm [shape: f32[32,128], index: 1, kind: input, shape index: {}]
  %s2 = inlined_call_operand.vmem [shape: f32[1,128], index: 2, kind: input, shape index: {}]
  %s3 = inlined_call_operand.vmem [shape: f32[16,4], index: 3, kind: input, shape index: {}]
  %s4 = inlined_call_operand.vmem [shape: f32[4,128], index: 4, kind: input, shape index: {}]
  %s5 = inlined_call_operand.hbm [shape: f32[16,128], index: 5, kind: output, shape index: {}]
  %s6 = sld [smem:[#allocation0]]
  $region42: #{tpu_custom_call.1} parent=0
    _
  %s8 = ssub.s32 1, %s6
  %s9 = scalar_select 0, %s8, %s6
  $region1: #{tpu_custom_call.1} parent=0
    #allocation3 [shape = 'u8[16384]{0}', space=vmem, size = 0x4000, scoped, tag = 'input window, operand 1, single buffered']
    #allocation4 [shape = 's32[1]{0}', space=sflag, size = 0x4, scoped, tag = 'scoped memory for tpu_custom_call.1']
    #allocation5 [shape = 's32[1]{0}', space=sflag, size = 0x4, scoped, tag = 'scoped memory for tpu_custom_call.1']
    #allocation6 [shape = 'u8[8192]{0}', space=vmem, size = 0x2000, scoped, tag = 'output window, operand 0, single buffered']
    %10 = vsyncpa [#allocation4], 0
    %11 = vsyncpa [#allocation5], 0
    // Predicated region
    $region2: #{tpu_custom_call.1} parent=1 // pred_check
      _
    $region3: #{tpu_custom_call.1} parent=1 // pred_check_branch
      %13 = sbr.rel (0) target = $region5
    $region4: #{tpu_custom_call.1} parent=1 // pred_region
      _
    $region5: #{tpu_custom_call.1} parent=1 // pred_fallthru
      _
    // Predicated region
    $region6: #{tpu_custom_call.1} parent=1 // pred_check
      _
    $region7: #{tpu_custom_call.1} parent=1 // pred_check_branch
      %15 = sbr.rel (0) target = $region9
    $region8: #{tpu_custom_call.1} parent=1 // pred_region
      %s17 = ssub.s32 512, 512
      %18 = vsyncadd [#allocation4], %s17
      %s19 = sshll.u32 [#allocation3], 4
      %s20 = int_to_ptr.vmem [resolvable:$true] %s19
      %25 = dma.hbm_to_vmem [thread:$0]  %s1, 512, %s20, [#allocation4], 128, 128, 8
    $region9: #{tpu_custom_call.1} parent=1 // pred_fallthru
      _
    // Predicated region
    $region10: #{tpu_custom_call.1} parent=1 // pred_check
      _
    $region11: #{tpu_custom_call.1} parent=1 // pred_check_branch
      %27 = sbr.rel (0) target = $region13
    $region12: #{tpu_custom_call.1} parent=1 // pred_region
      _
    $region13: #{tpu_custom_call.1} parent=1 // pred_fallthru
      _
    // Predicated region
    $region14: #{tpu_custom_call.1} parent=1 // pred_check
      _
    $region15: #{tpu_custom_call.1} parent=1 // pred_check_branch
      %29 = sbr.rel (0) target = $region17
    $region16: #{tpu_custom_call.1} parent=1 // pred_region
      _
    $region17: #{tpu_custom_call.1} parent=1 // pred_fallthru
      _
    // Predicated region
    $region18: #{tpu_custom_call.1} parent=1 // pred_check
      _
    $region19: #{tpu_custom_call.1} parent=1 // pred_check_branch
      %31 = sbr.rel (0) target = $region21
    $region20: #{tpu_custom_call.1} parent=1 // pred_region
      _
    $region21: #{tpu_custom_call.1} parent=1 // pred_fallthru
      _
    // Predicated region
    $region22: #{tpu_custom_call.1} parent=1 // pred_check
      _
    $region23: #{tpu_custom_call.1} parent=1 // pred_check_branch
      %33 = sbr.rel (0) target = $region25
    $region24: #{tpu_custom_call.1} parent=1 // pred_region
      %34 = dma.done [#allocation4], 512
    $region25: #{tpu_custom_call.1} parent=1 // pred_fallthru
      _
    %p35 = scmp.eq.s32.totalorder 0, 0
    // Predicated region
    $region26: #{tpu_custom_call.1} parent=1 // pred_check
      %p36 = pneg %p35
    $region27: #{tpu_custom_call.1} parent=1 // pred_check_branch
      %38 = sbr.rel (%p36) target = $region29
    $region28: #{tpu_custom_call.1} parent=1 // pred_region
      %39 = vst [vmem:[#allocation2] sm:$0xff] 0.0
      %40 = vst [vmem:[#allocation2 + $0x8] sm:$0xff] 0.0
    $region29: #{tpu_custom_call.1} parent=1 // pred_fallthru
      _
    %v41 = vld [vmem:[#allocation2] sm:$0xff]
    %v42 = vld [vmem:[#allocation2 + $0x8] sm:$0xff]
    %v43 = vld [vmem:[%s0] sm:$0xff]
    %v44 = vld [vmem:[%s0 + $0x8] sm:$0xff]
    %v45 = vld [vmem:[#allocation3] sm:$0xff]
    %v46 = vld [vmem:[#allocation3 + $0x8] sm:$0xff]
    %v47 = vld [vmem:[#allocation3 + $0x10] sm:$0xff]
    %v48 = vld [vmem:[#allocation3 + $0x18] sm:$0xff]
    %vm49 = vcmask 261120
    %v51 = vsel %vm49, %v43, 0
    %v54 = vsel %vm49, %v44, 0
    %56 = vmatprep.subr.mxu0 0.0
    %57 = vmatpush1.msra.mxu0 %v45
    %58 = vmatprep.subr.mxu0 0.0
    %59 = vmatpush1.msra.mxu0 %v46
    %60 = vmatprep.subr.mxu0 0.0
    %61 = vmatpush1.msra.mxu0 %v47
    %62 = vmatprep.subr.mxu0 0.0
    %63 = vmatpush1.msra.mxu0 %v48
    %64 = vmatprep.subr.mxu0 0.0
    %65 = vmatpush1.msra.mxu0 0.0
    %66 = vmatprep.subr.mxu0 0.0
    %67 = vmatpush1.msra.mxu0 0.0
    %68 = vmatprep.subr.mxu0 0.0
    %69 = vmatpush1.msra.mxu0 0.0
    %70 = vmatprep.subr.mxu0 0.0
    %71 = vmatpush1.msra.mxu0 0.0
    %72 = vmatprep.subr.mxu0 0.0
    %73 = vmatpush1.msra.mxu0 0.0
    %74 = vmatprep.subr.mxu0 0.0
    %75 = vmatpush1.msra.mxu0 0.0
    %76 = vmatprep.subr.mxu0 0.0
    %77 = vmatpush1.msra.mxu0 0.0
    %78 = vmatprep.subr.mxu0 0.0
    %79 = vmatpush1.msra.mxu0 0.0
    %80 = vmatprep.subr.mxu0 0.0
    %81 = vmatpush1.msra.mxu0 0.0
    %82 = vmatprep.subr.mxu0 0.0
    %83 = vmatpush1.msra.mxu0 0.0
    %84 = vmatprep.subr.mxu0 0.0
    %85 = vmatpush1.msra.mxu0 0.0
    %86 = vmatprep.subr.mxu0 0.0
    %87 = vmatpush1.msra.mxu0 0.0
    %88 = vmatprep.subr.mxu0 0.0
    %89 = vmatpush1.msra.mxu0 0.0
    %90 = vmatprep.subr.mxu0 0.0
    %91 = vmatpush1.msra.mxu0 0.0
    %92 = vmatprep.subr.mxu0 0.0
    %93 = vmatpush1.msra.mxu0 0.0
    %94 = vmatprep.subr.mxu0 0.0
    %95 = vmatpush1.msra.mxu0 0.0
    %96 = vmatprep.subr.mxu0 0.0
    %97 = vmatpush1.msra.mxu0 0.0
    %98 = vmatprep.subr.mxu0 0.0
    %99 = vmatpush1.msra.mxu0 0.0
    %100 = vmatprep.subr.mxu0 0.0
    %101 = vmatpush1.msra.mxu0 0.0
    %102 = vmatprep.subr.mxu0 0.0
    %103 = vmatpush1.msra.mxu0 0.0
    %104 = vmatprep.subr.mxu0 0.0
    %105 = vmatpush1.msra.mxu0 0.0
    %106 = vmatprep.subr.mxu0 0.0
    %107 = vmatpush1.msra.mxu0 0.0
    %108 = vmatprep.subr.mxu0 0.0
    %109 = vmatpush1.msra.mxu0 0.0
    %110 = vmatprep.subr.mxu0 0.0
    %111 = vmatpush1.msra.mxu0 0.0
    %112 = vmatprep.subr.mxu0 0.0
    %113 = vmatpush1.msra.mxu0 0.0
    %114 = vmatprep.subr.mxu0 0.0
    %115 = vmatpush1.msra.mxu0 0.0
    %116 = vmatprep.subr.mxu0 0.0
    %117 = vmatpush1.msra.mxu0 0.0
    %118 = vmatprep.subr.mxu0 0.0
    %119 = vmatpush1.msra.mxu0 0.0
    %120 = vmatprep.mubr.f32.mxu0 0.0
    %121 = vmatmul.mubr.f32.gmra.mrb[0].mxu0 %v51
    %v122 = vpop.f32.mrb[0].mxu0
    %v123 = vadd.f32 0.0, %v122
    %v124 = vpop.f32.mrb[0].mxu0
    %125 = vmatprep.mubr.f32.mxu0 0.0
    %126 = vmatmul.mubr.f32.gmra.mrb[0].mxu0 %v54
    %v127 = vpop.f32.mrb[0].mxu0
    %v128 = vadd.f32 0.0, %v127
    %v129 = vpop.f32.mrb[0].mxu0
    %130 = vdwg.mxu0
    %v131 = vadd.f32 %v41, %v123
    %v132 = vadd.f32 %v42, %v128
    %133 = vst [vmem:[#allocation2] sm:$0xff] %v131
    %134 = vst [vmem:[#allocation2 + $0x8] sm:$0xff] %v132
    // Predicated region
    $region30: #{tpu_custom_call.1} parent=1 // pred_check
      %p135 = pneg %p35
    $region31: #{tpu_custom_call.1} parent=1 // pred_check_branch
      %137 = sbr.rel (%p135) target = $region33
    $region32: #{tpu_custom_call.1} parent=1 // pred_region
      %v138 = vld [vmem:[%s3] sm:$0xff]
      %v139 = vld [vmem:[%s3 + $0x8] sm:$0xff]
      %v140 = vld [vmem:[%s4] sm:$0xf]
      %vm141 = vcmask 31744
      %v143 = vsel %vm141, %v138, 0
      %v146 = vsel %vm141, %v139, 0
      %vm148 = vcmask 1043456
      %v150 = vsel %vm148, %v140, 0
      %152 = vmatprep.subr.mxu0 0.0
      %153 = vmatpush1.msra.mxu0 %v150
      %154 = vmatprep.subr.mxu0 0.0
      %155 = vmatpush1.msra.mxu0 0.0
      %156 = vmatprep.subr.mxu0 0.0
      %157 = vmatpush1.msra.mxu0 0.0
      %158 = vmatprep.subr.mxu0 0.0
      %159 = vmatpush1.msra.mxu0 0.0
      %160 = vmatprep.subr.mxu0 0.0
      %161 = vmatpush1.msra.mxu0 0.0
      %162 = vmatprep.subr.mxu0 0.0
      %163 = vmatpush1.msra.mxu0 0.0
      %164 = vmatprep.subr.mxu0 0.0
      %165 = vmatpush1.msra.mxu0 0.0
      %166 = vmatprep.subr.mxu0 0.0
      %167 = vmatpush1.msra.mxu0 0.0
      %168 = vmatprep.subr.mxu0 0.0
      %169 = vmatpush1.msra.mxu0 0.0
      %170 = vmatprep.subr.mxu0 0.0
      %171 = vmatpush1.msra.mxu0 0.0
      %172 = vmatprep.subr.mxu0 0.0
      %173 = vmatpush1.msra.mxu0 0.0
      %174 = vmatprep.subr.mxu0 0.0
      %175 = vmatpush1.msra.mxu0 0.0
      %176 = vmatprep.subr.mxu0 0.0
      %177 = vmatpush1.msra.mxu0 0.0
      %178 = vmatprep.subr.mxu0 0.0
      %179 = vmatpush1.msra.mxu0 0.0
      %180 = vmatprep.subr.mxu0 0.0
      %181 = vmatpush1.msra.mxu0 0.0
      %182 = vmatprep.subr.mxu0 0.0
      %183 = vmatpush1.msra.mxu0 0.0
      %184 = vmatprep.subr.mxu0 0.0
      %185 = vmatpush1.msra.mxu0 0.0
      %186 = vmatprep.subr.mxu0 0.0
      %187 = vmatpush1.msra.mxu0 0.0
      %188 = vmatprep.subr.mxu0 0.0
      %189 = vmatpush1.msra.mxu0 0.0
      %190 = vmatprep.subr.mxu0 0.0
      %191 = vmatpush1.msra.mxu0 0.0
      %192 = vmatprep.subr.mxu0 0.0
      %193 = vmatpush1.msra.mxu0 0.0
      %194 = vmatprep.subr.mxu0 0.0
      %195 = vmatpush1.msra.mxu0 0.0
      %196 = vmatprep.subr.mxu0 0.0
      %197 = vmatpush1.msra.mxu0 0.0
      %198 = vmatprep.subr.mxu0 0.0
      %199 = vmatpush1.msra.mxu0 0.0
      %200 = vmatprep.subr.mxu0 0.0
      %201 = vmatpush1.msra.mxu0 0.0
      %202 = vmatprep.subr.mxu0 0.0
      %203 = vmatpush1.msra.mxu0 0.0
      %204 = vmatprep.subr.mxu0 0.0
      %205 = vmatpush1.msra.mxu0 0.0
      %206 = vmatprep.subr.mxu0 0.0
      %207 = vmatpush1.msra.mxu0 0.0
      %208 = vmatprep.subr.mxu0 0.0
      %209 = vmatpush1.msra.mxu0 0.0
      %210 = vmatprep.subr.mxu0 0.0
      %211 = vmatpush1.msra.mxu0 0.0
      %212 = vmatprep.subr.mxu0 0.0
      %213 = vmatpush1.msra.mxu0 0.0
      %214 = vmatprep.subr.mxu0 0.0
      %215 = vmatpush1.msra.mxu0 0.0
      %216 = vmatprep.mubr.f32.mxu0 0.0
      %217 = vmatmul.mubr.f32.gmra.mrb[0].mxu0 %v143
      %v218 = vpop.f32.mrb[0].mxu0
      %v219 = vadd.f32 0.0, %v218
      %v220 = vpop.f32.mrb[0].mxu0
      %221 = vmatprep.mubr.f32.mxu0 0.0
      %222 = vmatmul.mubr.f32.gmra.mrb[0].mxu0 %v146
      %v223 = vpop.f32.mrb[0].mxu0
      %v224 = vadd.f32 0.0, %v223
      %v225 = vpop.f32.mrb[0].mxu0
      %226 = vdwg.mxu0
      %v227 = vld [vmem:[#allocation2] sm:$0xff]
      %v228 = vld [vmem:[#allocation2 + $0x8] sm:$0xff]
      %v229 = vld [vmem:[%s2] sm:$0x1]
      %v231 = vlaneseq
      %v232 = vshrl.u32 %v231, 7
      %v233 = vsub.s32 0, %v232
      %v234 = vrot.slane %v229, %v233
      %v236 = vadd.f32 %v227, %v234
      %v237 = vadd.f32 %v228, %v234
      %v238 = vadd.f32 %v236, %v219
      %v239 = vadd.f32 %v237, %v224
      %240 = vst [vmem:[#allocation6] sm:$0xff] %v238
      %241 = vst [vmem:[#allocation6 + $0x8] sm:$0xff] %v239
    $region33: #{tpu_custom_call.1} parent=1 // pred_fallthru
      _
    // Predicated region
    $region34: #{tpu_custom_call.1} parent=1 // pred_check
      _
    $region35: #{tpu_custom_call.1} parent=1 // pred_check_branch
      %243 = sbr.rel (0) target = $region37
    $region36: #{tpu_custom_call.1} parent=1 // pred_region
      %s245 = ssub.s32 256, 256
      %246 = vsyncadd [#allocation5], %s245
      %s247 = sshll.u32 [#allocation6], 4
      %s248 = int_to_ptr.vmem [resolvable:$true] %s247
      %253 = dma.vmem_to_hbm [thread:$0]  %s248, 256, %s5, [#allocation5], 128, 128, 8
    $region37: #{tpu_custom_call.1} parent=1 // pred_fallthru
      _
    // Predicated region
    $region38: #{tpu_custom_call.1} parent=1 // pred_check
      _
    $region39: #{tpu_custom_call.1} parent=1 // pred_check_branch
      %255 = sbr.rel (0) target = $region41
    $region40: #{tpu_custom_call.1} parent=1 // pred_region
      %256 = dma.done [#allocation5], 256
    $region41: #{tpu_custom_call.1} parent=1 // pred_fallthru
      _
    %257 = vsyncpa [#allocation4], 1
    %258 = vsyncpa [#allocation5], 1

</llo_original>
